<compile_context>
chip_gen: v7x
topology: tpu7x:2x2x1
jax: 0.10.0
libtpu: 0.0.40
codegen_flags: <defaults>
</compile_context>

<pallas_src>
from functools import partial

import jax
import jax.numpy as jnp
from jax.experimental import pallas as pl
from jax.experimental.pallas import tpu as pltpu


def _residual_kernel(fn, compute_dtype, x_ref, o_ref):
    """o = fn(x) + x on one VMEM tile."""
    x = x_ref[...]
    xc = x.astype(compute_dtype)
    o_ref[...] = (fn(xc) + xc).astype(o_ref.dtype)


def _sublane_multiple(dtype):
    """Minimum sublane multiple for packed layouts: 8 f32, 16 bf16, 32 int8."""
    itemsize = jnp.dtype(dtype).itemsize
    return {4: 8, 2: 16, 1: 32}.get(itemsize, 8)


def _vmem_capacity_bytes():
    try:
        info = pltpu.get_tpu_info()
        return int(getattr(info, "vmem_capacity_bytes", 128 * 1024 * 1024))
    except Exception:  # pragma: no cover - conservative fallback off-TPU
        return 128 * 1024 * 1024


def _generation_budgets():
    """Return (max_block_bytes, vmem_limit_bytes) for this TPU generation."""
    vmem = _vmem_capacity_bytes()
    if vmem <= 96 * 1024 * 1024:
        # v7x-class: 64 MiB VMEM per TensorCore -> 8 MiB blocks, <=48 MiB scoped.
        return 8 * 1024 * 1024, 48 * 1024 * 1024
    # v5e / v6e: 128 MiB VMEM -> 16 MiB blocks; 2 in + 2 out double-buffered
    # is 64 MiB, so ask for 80 MiB scoped (v5e default is only 16 MiB).
    return 16 * 1024 * 1024, 80 * 1024 * 1024


def residual_call(fn, x, *, max_cols=1024, compute_dtype=jnp.float32,
                  alias_input=True, max_block_bytes=None, vmem_limit_bytes=None):
    """Equivalent of Residual(fn)(x) = fn(x) + x, fused in one Pallas kernel.

    `fn` must be elementwise (shape-preserving) so per-tile application is exact.
    """
    orig_shape = x.shape
    dtype = x.dtype
    total = int(x.size)
    itemsize = jnp.dtype(dtype).itemsize
    sublane = _sublane_multiple(dtype)

    gen_block_bytes, gen_vmem_limit = _generation_budgets()
    if max_block_bytes is None:
        max_block_bytes = gen_block_bytes
    if vmem_limit_bytes is None:
        vmem_limit_bytes = gen_vmem_limit

    # ---- lane (last) dim: widest 128-multiple that divides the tensor ------
    cols = max_cols
    while cols > 128 and total % cols != 0:
        cols //= 2  # 1024 -> 512 -> 256 -> 128
    needs_pad = (total % cols) != 0
    if needs_pad:
        cols = 128  # rare path: pad < 128 elements below
    rows = -(-total // cols)
    padded_total = rows * cols

    # ---- block sizing -------------------------------------------------------
    rows_rounded = -(-rows // sublane) * sublane
    rows_per_budget = max(
        sublane, (max_block_bytes // (cols * itemsize)) // sublane * sublane)
    # Guarantee >= 2 grid steps whenever there is more than one sublane-row of
    # work, so dimension_semantics=("parallel",) can shard across both v7x TCs.
    if rows_rounded > sublane:
        half_cap = -(-(rows_rounded // 2) // sublane) * sublane
    else:
        half_cap = rows_rounded
    block_rows = max(sublane, min(rows_per_budget, half_cap))
    grid = (pl.cdiv(rows, block_rows),)

    # ---- flatten (no pad in the common case) -------------------------------
    flat = x.reshape(-1)
    if needs_pad:
        flat = jnp.pad(flat, (0, padded_total - total))
    x2 = flat.reshape(rows, cols)

    cost = pl.CostEstimate(
        flops=8 * padded_total,
        transcendentals=padded_total,
        bytes_accessed=2 * padded_total * itemsize,
    )

    out2 = pl.pallas_call(
        partial(_residual_kernel, fn, compute_dtype),
        out_shape=jax.ShapeDtypeStruct((rows, cols), dtype),
        grid_spec=pltpu.PrefetchScalarGridSpec(
            num_scalar_prefetch=0,
            grid=grid,
            in_specs=[pl.BlockSpec((block_rows, cols), lambda i: (i, 0))],
            out_specs=pl.BlockSpec((block_rows, cols), lambda i: (i, 0)),
        ),
        compiler_params=pltpu.CompilerParams(
            dimension_semantics=("parallel",),
            vmem_limit_bytes=vmem_limit_bytes,
        ),
        cost_estimate=cost,
        # Alias output onto the (freshly reshaped) input buffer when there is
        # no padded temporary: saves one full-tensor HBM allocation.
        input_output_aliases=({0: 0} if (alias_input and not needs_pad) else {}),
    )(x2)

    out_flat = out2.reshape(-1)
    if needs_pad:
        out_flat = out_flat[:total]
    return out_flat.reshape(orig_shape)


if __name__ == "__main__":
    key = jax.random.PRNGKey(0)
    # NCHW, matching the PyTorch convention: batch=2, channels=4, spatial=16x16
    x = jax.random.normal(key, (2, 4, 16, 16), dtype=jnp.float32)

    # Wrapped fn (what Residual would wrap): elementwise GELU.
    # NOTE: jax.nn.gelu defaults to the tanh approximation; PyTorch nn.GELU
    # defaults to exact erf.  Pass approximate=False for bit-parity if needed.
    fn = jax.nn.gelu

    # Reference computed up-front (plain JAX): Residual(fn)(x) = fn(x) + x.
    ref = fn(x) + x

    out = residual_call(fn, x)
    out = jax.block_until_ready(out)

    assert out.shape == x.shape
    assert out.dtype == x.dtype
    assert jnp.allclose(out, ref, atol=1e-5, rtol=1e-5), "mismatch vs reference"

    print("KERNEL_OK")
</pallas_src>

<mosaic_0001>
module attributes {stable_mosaic.version = 11 : i64} {
  func.func @_residual_kernel(%arg0: i32, %arg1: memref<8x1024xf32, #tpu.memory_space<vmem>>, %arg2: memref<8x1024xf32, #tpu.memory_space<vmem>>) attributes {dimension_semantics = [#tpu.dimension_semantics<parallel>], iteration_bounds = array<i64: 1>, scalar_prefetch = 0 : i64, scratch_operands = 0 : i64, tpu.core_type = #tpu.core_type<tc>, window_params = [{transform_indices = @transform_0, window_bounds = array<i64: 8, 1024>}, {transform_indices = @transform_1, window_bounds = array<i64: 8, 1024>}]} {
    %c0 = arith.constant 0 : index
    %c0_0 = arith.constant 0 : index
    %0 = vector.load %arg1[%c0, %c0_0] : memref<8x1024xf32, #tpu.memory_space<vmem>>, vector<8x1024xf32>
    %1 = arith.mulf %0, %0 : vector<8x1024xf32>
    %2 = arith.mulf %0, %1 : vector<8x1024xf32>
    %cst = arith.constant 4.471500e-02 : f32
    %3 = vector.broadcast %cst : f32 to vector<8x1024xf32>
    %4 = arith.mulf %3, %2 : vector<8x1024xf32>
    %5 = arith.addf %0, %4 : vector<8x1024xf32>
    %cst_1 = arith.constant 0.797884583 : f32
    %6 = vector.broadcast %cst_1 : f32 to vector<8x1024xf32>
    %7 = arith.mulf %6, %5 : vector<8x1024xf32>
    %8 = math.tanh %7 : vector<8x1024xf32>
    %cst_2 = arith.constant 1.000000e+00 : f32
    %9 = vector.broadcast %cst_2 : f32 to vector<8x1024xf32>
    %10 = arith.addf %9, %8 : vector<8x1024xf32>
    %cst_3 = arith.constant 5.000000e-01 : f32
    %11 = vector.broadcast %cst_3 : f32 to vector<8x1024xf32>
    %12 = arith.mulf %11, %10 : vector<8x1024xf32>
    %13 = arith.mulf %0, %12 : vector<8x1024xf32>
    %14 = arith.addf %13, %0 : vector<8x1024xf32>
    %c0_4 = arith.constant 0 : index
    %c0_5 = arith.constant 0 : index
    %15 = vector.load %arg2[%c0_4, %c0_5] : memref<8x1024xf32, #tpu.memory_space<vmem>>, vector<8x1024xf32>
    tpu.vector_store %arg2[%c0_4, %c0_5], %14 {strides = array<i32>} : memref<8x1024xf32, #tpu.memory_space<vmem>>, vector<8x1024xf32>,
    return
  }
  func.func @transform_0(%arg0: i32) -> (i32, i32) {
    %c0_i32 = arith.constant 0 : i32
    %c0_i32_0 = arith.constant 0 : i32
    return %arg0, %c0_i32 : i32, i32
  }
  func.func @transform_1(%arg0: i32) -> (i32, i32) {
    %c0_i32 = arith.constant 0 : i32
    %c0_i32_0 = arith.constant 0 : i32
    return %arg0, %c0_i32 : i32, i32
  }
}

</mosaic_0001>

<llo_original>
// kernel: tpu_custom_call.1
$region0: #{tpu_custom_call.1}
  #allocation0 [shape = 'u32[]', space=smem, size = 0x4, offset = 0x4, fixed_abs, tag = 'smem constant byte address 0x4 - core index']
  #allocation1 [shape = 'u32[144,128]{1,0:T(1,128)}', space=vmem, size = 0x12000, scoped, tag = 'internal scratch']
  %s0 = inlined_call_operand.hbm [shape: f32[2,1024], index: 0, kind: input, shape index: {}, may-alias: {0,1}]
  %s1 = inlined_call_operand.hbm [shape: f32[2,1024], index: 1, kind: output, shape index: {}, may-alias: {0,1}]
  %s2 = sld [smem:[#allocation0]]
  $region18: #{tpu_custom_call.1} parent=0
    _
  %s4 = ssub.s32 1, %s2
  %s5 = scalar_select 0, %s4, %s2
  $region1: #{tpu_custom_call.1} parent=0
    #allocation2 [shape = 'u8[32768]{0}', space=vmem, size = 0x8000, scoped, tag = 'input window, operand 0, single buffered']
    #allocation3 [shape = 's32[1]{0}', space=sflag, size = 0x4, scoped, tag = 'scoped memory for tpu_custom_call.1']
    #allocation4 [shape = 's32[1]{0}', space=sflag, size = 0x4, scoped, tag = 'scoped memory for tpu_custom_call.1']
    #allocation5 [shape = 'u8[32768]{0}', space=vmem, size = 0x8000, scoped, tag = 'output window, operand 0, single buffered']
    %6 = vsyncpa [#allocation3], 0
    %7 = vsyncpa [#allocation4], 0
    // Predicated region
    $region2: #{tpu_custom_call.1} parent=1 // pred_check
      _
    $region3: #{tpu_custom_call.1} parent=1 // pred_check_branch
      %9 = sbr.rel (0) target = $region5
    $region4: #{tpu_custom_call.1} parent=1 // pred_region
      %s11 = ssub.s32 1024, 256
      %12 = vsyncadd [#allocation3], %s11
      %s13 = sshll.u32 [#allocation2], 4
      %s14 = int_to_ptr.vmem [resolvable:$true] %s13
      %19 = dma.hbm_to_vmem [thread:$0]  %s0, 256, %s14, [#allocation3], 256, 256, 16
    $region5: #{tpu_custom_call.1} parent=1 // pred_fallthru
      _
    // Predicated region
    $region6: #{tpu_custom_call.1} parent=1 // pred_check
      _
    $region7: #{tpu_custom_call.1} parent=1 // pred_check_branch
      %21 = sbr.rel (0) target = $region9
    $region8: #{tpu_custom_call.1} parent=1 // pred_region
      %22 = dma.done [#allocation3], 1024
    $region9: #{tpu_custom_call.1} parent=1 // pred_fallthru
      _
    %v23 = vld [vmem:[#allocation2] sm:$0xff]
    %v24 = vld [vmem:[#allocation2 + $0x8] sm:$0xff]
    %v25 = vld [vmem:[#allocation2 + $0x10] sm:$0xff]
    %v26 = vld [vmem:[#allocation2 + $0x18] sm:$0xff]
    %v27 = vld [vmem:[#allocation2 + $0x20] sm:$0xff]
    %v28 = vld [vmem:[#allocation2 + $0x28] sm:$0xff]
    %v29 = vld [vmem:[#allocation2 + $0x30] sm:$0xff]
    %v30 = vld [vmem:[#allocation2 + $0x38] sm:$0xff]
    %v31 = vmul.f32 %v23, %v23
    %v32 = vmul.f32 %v24, %v24
    %v33 = vmul.f32 %v25, %v25
    %v34 = vmul.f32 %v26, %v26
    %v35 = vmul.f32 %v27, %v27
    %v36 = vmul.f32 %v28, %v28
    %v37 = vmul.f32 %v29, %v29
    %v38 = vmul.f32 %v30, %v30
    %v39 = vmul.f32 %v23, %v31
    %v40 = vmul.f32 %v24, %v32
    %v41 = vmul.f32 %v25, %v33
    %v42 = vmul.f32 %v26, %v34
    %v43 = vmul.f32 %v27, %v35
    %v44 = vmul.f32 %v28, %v36
    %v45 = vmul.f32 %v29, %v37
    %v46 = vmul.f32 %v30, %v38
    %v47 = vmul.f32 %v39, 0.044715
    %v48 = vmul.f32 %v40, 0.044715
    %v49 = vmul.f32 %v41, 0.044715
    %v50 = vmul.f32 %v42, 0.044715
    %v51 = vmul.f32 %v43, 0.044715
    %v52 = vmul.f32 %v44, 0.044715
    %v53 = vmul.f32 %v45, 0.044715
    %v54 = vmul.f32 %v46, 0.044715
    %v55 = vadd.f32 %v23, %v47
    %v56 = vadd.f32 %v24, %v48
    %v57 = vadd.f32 %v25, %v49
    %v58 = vadd.f32 %v26, %v50
    %v59 = vadd.f32 %v27, %v51
    %v60 = vadd.f32 %v28, %v52
    %v61 = vadd.f32 %v29, %v53
    %v62 = vadd.f32 %v30, %v54
    %v63 = vmul.f32 %v55, 0.7978846
    %v64 = vmul.f32 %v56, 0.7978846
    %v65 = vmul.f32 %v57, 0.7978846
    %v66 = vmul.f32 %v58, 0.7978846
    %v67 = vmul.f32 %v59, 0.7978846
    %v68 = vmul.f32 %v60, 0.7978846
    %v69 = vmul.f32 %v61, 0.7978846
    %v70 = vmul.f32 %v62, 0.7978846
    %v71 = vtanh.pop %v63
    %v72 = vtanh.pop %v64
    %v73 = vtanh.pop %v65
    %v74 = vtanh.pop %v66
    %v75 = vtanh.pop %v67
    %v76 = vtanh.pop %v68
    %v77 = vtanh.pop %v69
    %v78 = vtanh.pop %v70
    %v79 = vadd.f32 %v71, 1.0
    %v80 = vadd.f32 %v72, 1.0
    %v81 = vadd.f32 %v73, 1.0
    %v82 = vadd.f32 %v74, 1.0
    %v83 = vadd.f32 %v75, 1.0
    %v84 = vadd.f32 %v76, 1.0
    %v85 = vadd.f32 %v77, 1.0
    %v86 = vadd.f32 %v78, 1.0
    %v87 = vmul.f32 %v79, 0.5
    %v88 = vmul.f32 %v80, 0.5
    %v89 = vmul.f32 %v81, 0.5
    %v90 = vmul.f32 %v82, 0.5
    %v91 = vmul.f32 %v83, 0.5
    %v92 = vmul.f32 %v84, 0.5
    %v93 = vmul.f32 %v85, 0.5
    %v94 = vmul.f32 %v86, 0.5
    %v95 = vmul.f32 %v23, %v87
    %v96 = vmul.f32 %v24, %v88
    %v97 = vmul.f32 %v25, %v89
    %v98 = vmul.f32 %v26, %v90
    %v99 = vmul.f32 %v27, %v91
    %v100 = vmul.f32 %v28, %v92
    %v101 = vmul.f32 %v29, %v93
    %v102 = vmul.f32 %v30, %v94
    %v103 = vadd.f32 %v95, %v23
    %v104 = vadd.f32 %v96, %v24
    %v105 = vadd.f32 %v97, %v25
    %v106 = vadd.f32 %v98, %v26
    %v107 = vadd.f32 %v99, %v27
    %v108 = vadd.f32 %v100, %v28
    %v109 = vadd.f32 %v101, %v29
    %v110 = vadd.f32 %v102, %v30
    %111 = vst [vmem:[#allocation5] sm:$0xff] %v103
    %112 = vst [vmem:[#allocation5 + $0x8] sm:$0xff] %v104
    %113 = vst [vmem:[#allocation5 + $0x10] sm:$0xff] %v105
    %114 = vst [vmem:[#allocation5 + $0x18] sm:$0xff] %v106
    %115 = vst [vmem:[#allocation5 + $0x20] sm:$0xff] %v107
    %116 = vst [vmem:[#allocation5 + $0x28] sm:$0xff] %v108
    %117 = vst [vmem:[#allocation5 + $0x30] sm:$0xff] %v109
    %118 = vst [vmem:[#allocation5 + $0x38] sm:$0xff] %v110
    // Predicated region
    $region10: #{tpu_custom_call.1} parent=1 // pred_check
      _
    $region11: #{tpu_custom_call.1} parent=1 // pred_check_branch
      %120 = sbr.rel (0) target = $region13
    $region12: #{tpu_custom_call.1} parent=1 // pred_region
      %s122 = ssub.s32 1024, 256
      %123 = vsyncadd [#allocation4], %s122
      %s124 = sshll.u32 [#allocation5], 4
      %s125 = int_to_ptr.vmem [resolvable:$true] %s124
      %130 = dma.vmem_to_hbm [thread:$0]  %s125, 256, %s1, [#allocation4], 256, 256, 16
    $region13: #{tpu_custom_call.1} parent=1 // pred_fallthru
      _
    // Predicated region
    $region14: #{tpu_custom_call.1} parent=1 // pred_check
      _
    $region15: #{tpu_custom_call.1} parent=1 // pred_check_branch
      %132 = sbr.rel (0) target = $region17
    $region16: #{tpu_custom_call.1} parent=1 // pred_region
      %133 = dma.done [#allocation4], 1024
    $region17: #{tpu_custom_call.1} parent=1 // pred_fallthru
      _
    %134 = vsyncpa [#allocation3], 1
    %135 = vsyncpa [#allocation4], 1

</llo_original>
